<compile_context>
chip_gen: v7x
topology: tpu7x:2x2x1
jax: 0.10.0
libtpu: 0.0.40
codegen_flags: <defaults>
</compile_context>

<pallas_src>
import functools

import jax
import jax.numpy as jnp
from jax.experimental import pallas as pl
from jax.experimental.pallas import tpu as pltpu

_LANES = 128
_SUBLANES = 8


def _count_loss_kernel(scale_ref, pred_ref, gt_ref, out_ref,
                       acc_sq_ref, acc_rel_ref,
                       *, tile_rows, rows_valid, ragged):
    """One (tile_rows, 128) tile per grid step; two (8,128) vreg accumulators."""
    i = pl.program_id(0)
    nsteps = pl.num_programs(0)

    @pl.when(i == 0)
    def _():
        acc_sq_ref[...] = jnp.zeros_like(acc_sq_ref)
        acc_rel_ref[...] = jnp.zeros_like(acc_rel_ref)

    pred = pred_ref[...].astype(jnp.float32)
    gt = gt_ref[...].astype(jnp.float32)
    diff = pred - gt
    sq = diff * diff

    denom = gt + 1.0
    # EUP approximate reciprocal + one Newton-Raphson refinement (~f32 accuracy)
    # instead of an exact VALU divide.
    r = pl.reciprocal(denom, approx=True)
    r = r * (2.0 - denom * r)
    rel = jnp.abs(diff) * r

    def _accumulate(sq_v, rel_v):
        # (tile_rows,128) -> (tile_rows//8, 8, 128) is layout-preserving; the
        # axis-0 sum is pure vreg adds (no per-tile XLU reduce).
        acc_sq_ref[...] += jnp.sum(sq_v.reshape(-1, _SUBLANES, _LANES), axis=0)
        acc_rel_ref[...] += jnp.sum(rel_v.reshape(-1, _SUBLANES, _LANES), axis=0)

    if ragged:
        # Only the last tile can extend past the true row extent (garbage data
        # in the padded region of the block) -> mask it there only.
        @pl.when(i < nsteps - 1)
        def _():
            _accumulate(sq, rel)

        @pl.when(i == nsteps - 1)
        def _():
            row = jax.lax.broadcasted_iota(jnp.int32, (tile_rows, _LANES), 0)
            valid = (i * tile_rows + row) < rows_valid
            _accumulate(jnp.where(valid, sq, 0.0),
                        jnp.where(valid, rel, 0.0))
    else:
        _accumulate(sq, rel)

    @pl.when(i == nsteps - 1)
    def _():
        # Single XLU reduce + scalar store, once per kernel. Scales applied here.
        out_ref[0, 0] = (scale_ref[0] * jnp.sum(acc_sq_ref[...])
                         + scale_ref[1] * jnp.sum(acc_rel_ref[...]))


def improved_count_loss(pred_count, gt_count, alpha=1.0, beta=0.1,
                        *, max_tile_rows=8192, min_pallas_size=16384):
    """Pallas TPU implementation of ImprovedCountLoss.forward.

    Returns scalar f32: alpha * mean((pred-gt)^2) + beta * mean(|pred-gt|/(gt+1)).
    """
    assert pred_count.shape == gt_count.shape
    n = pred_count.size
    assert n > 0

    if n < min_pallas_size:
        # Per-image count vectors: fixed pallas_call overhead dominates.
        pred = pred_count.astype(jnp.float32)
        gt = gt_count.astype(jnp.float32)
        diff = pred - gt
        return (alpha * jnp.mean(diff * diff)
                + beta * jnp.mean(jnp.abs(diff) / (gt + 1.0)))

    pred_flat = pred_count.reshape(-1)
    gt_flat = gt_count.reshape(-1)

    # Pad only to a multiple of 128 lanes (<=127 zeros) so the flat->(rows,128)
    # reshape is a free bitcast; zero padding contributes 0 to both terms.
    rem = n % _LANES
    if rem:
        pad = _LANES - rem
        pred_flat = jnp.pad(pred_flat, (0, pad))
        gt_flat = jnp.pad(gt_flat, (0, pad))
    rows = pred_flat.size // _LANES

    pred2d = pred_flat.reshape(rows, _LANES)
    gt2d = gt_flat.reshape(rows, _LANES)

    tile_rows = min(int(max_tile_rows), rows)
    tile_rows = max(_SUBLANES, (tile_rows // _SUBLANES) * _SUBLANES)
    grid_steps = pl.cdiv(rows, tile_rows)
    ragged = (rows % tile_rows) != 0

    # Runtime scales in SMEM -> one compiled kernel per shape, not per (alpha, beta).
    scales = jnp.array([alpha / n, beta / n], dtype=jnp.float32)

    kernel = functools.partial(_count_loss_kernel, tile_rows=tile_rows,
                               rows_valid=rows, ragged=ragged)

    out = pl.pallas_call(
        kernel,
        out_shape=jax.ShapeDtypeStruct((1, 1), jnp.float32),
        grid_spec=pltpu.PrefetchScalarGridSpec(
            num_scalar_prefetch=0,
            grid=(grid_steps,),
            in_specs=[
                pl.BlockSpec(memory_space=pltpu.SMEM),            # (2,) scales
                pl.BlockSpec((tile_rows, _LANES), lambda i: (i, 0)),
                pl.BlockSpec((tile_rows, _LANES), lambda i: (i, 0)),
            ],
            out_specs=pl.BlockSpec(memory_space=pltpu.SMEM),      # (1,1) scalar
            scratch_shapes=[pltpu.VMEM((_SUBLANES, _LANES), jnp.float32),
                            pltpu.VMEM((_SUBLANES, _LANES), jnp.float32)],
        ),
        compiler_params=pltpu.CompilerParams(
            dimension_semantics=("arbitrary",),
            vmem_limit_bytes=32 * 1024 * 1024,
        ),
    )(scales, pred2d, gt2d)
    return out[0, 0]


def _reference_loss(pred, gt, alpha=1.0, beta=0.1):
    pred = pred.astype(jnp.float32)
    gt = gt.astype(jnp.float32)
    mse = jnp.mean((pred - gt) ** 2)
    rel = jnp.mean(jnp.abs(pred - gt) / (gt + 1.0))
    return alpha * mse + beta * rel


if __name__ == "__main__":
    key = jax.random.PRNGKey(0)
    k1, k2, k3, k4, k5, k6 = jax.random.split(key, 6)

    # --- Test 1: typical per-image count vector (small-n fast path) ---
    pred1 = jax.random.uniform(k1, (8,), jnp.float32, minval=0.0, maxval=50.0)
    gt1 = jax.random.uniform(k2, (8,), jnp.float32, minval=0.0, maxval=50.0)
    loss1 = jax.block_until_ready(improved_count_loss(pred1, gt1, alpha=1.0, beta=0.1))
    ref1 = _reference_loss(pred1, gt1, alpha=1.0, beta=0.1)
    assert jnp.allclose(loss1, ref1, rtol=1e-5, atol=1e-5), (loss1, ref1)

    # --- Test 2: n % 128 != 0 (lane pad) + multi-step grid, forced through kernel ---
    pred2 = jax.random.uniform(k3, (2, 1500), jnp.float32, minval=0.0, maxval=50.0)
    gt2 = jax.random.uniform(k4, (2, 1500), jnp.float32, minval=0.0, maxval=50.0)
    loss2 = improved_count_loss(pred2, gt2, alpha=0.5, beta=0.25,
                                max_tile_rows=8, min_pallas_size=0)
    loss2 = jax.block_until_ready(loss2)
    ref2 = _reference_loss(pred2, gt2, alpha=0.5, beta=0.25)
    assert jnp.allclose(loss2, ref2, rtol=1e-4, atol=1e-4), (loss2, ref2)

    # --- Test 3: bf16 inputs (native-dtype streaming) + ragged last tile (in-kernel mask) ---
    pred3 = jax.random.uniform(k5, (40, 128), jnp.float32, minval=0.0, maxval=50.0).astype(jnp.bfloat16)
    gt3 = jax.random.uniform(k6, (40, 128), jnp.float32, minval=0.0, maxval=50.0).astype(jnp.bfloat16)
    loss3 = improved_count_loss(pred3, gt3, alpha=1.0, beta=0.1,
                                max_tile_rows=16, min_pallas_size=0)
    loss3 = jax.block_until_ready(loss3)
    ref3 = _reference_loss(pred3, gt3, alpha=1.0, beta=0.1)
    assert jnp.allclose(loss3, ref3, rtol=1e-4, atol=1e-4), (loss3, ref3)

    print("KERNEL_OK")
</pallas_src>

<mosaic_0001>
module attributes {stable_mosaic.version = 11 : i64} {
  func.func @_count_loss_kernel(%arg0: i32, %arg1: memref<2xf32, #tpu.memory_space<smem>>, %arg2: memref<8x128xf32, #tpu.memory_space<vmem>>, %arg3: memref<8x128xf32, #tpu.memory_space<vmem>>, %arg4: memref<1x1xf32, #tpu.memory_space<smem>>, %arg5: memref<8x128xf32, #tpu.memory_space<vmem>>, %arg6: memref<8x128xf32, #tpu.memory_space<vmem>>) attributes {dimension_semantics = [#tpu.dimension_semantics<arbitrary>], iteration_bounds = array<i64: 3>, scalar_prefetch = 0 : i64, scratch_operands = 2 : i64, tpu.core_type = #tpu.core_type<tc>, window_params = [{transform_indices = @transform_0, window_bounds = array<i64: 2>}, {transform_indices = @transform_1, window_bounds = array<i64: 8, 128>}, {transform_indices = @transform_2, window_bounds = array<i64: 8, 128>}, {transform_indices = @transform_3, window_bounds = array<i64: 1, 1>}]} {
    %c0_i32 = arith.constant 0 : i32
    %0 = arith.cmpi eq, %arg0, %c0_i32 : i32
    %1 = arith.extui %0 : i1 to i32
    %c0_i32_0 = arith.constant 0 : i32
    %2 = arith.cmpi ne, %1, %c0_i32_0 : i32
    scf.if %2 {
      %cst_16 = arith.constant 0.000000e+00 : f32
      %29 = vector.broadcast %cst_16 : f32 to vector<8x128xf32>
      %c0_17 = arith.constant 0 : index
      %c0_18 = arith.constant 0 : index
      %30 = vector.load %arg5[%c0_17, %c0_18] : memref<8x128xf32, #tpu.memory_space<vmem>>, vector<8x128xf32>
      tpu.vector_store %arg5[%c0_17, %c0_18], %29 {strides = array<i32>} : memref<8x128xf32, #tpu.memory_space<vmem>>, vector<8x128xf32>,
      %cst_19 = arith.constant 0.000000e+00 : f32
      %31 = vector.broadcast %cst_19 : f32 to vector<8x128xf32>
      %c0_20 = arith.constant 0 : index
      %c0_21 = arith.constant 0 : index
      %32 = vector.load %arg6[%c0_20, %c0_21] : memref<8x128xf32, #tpu.memory_space<vmem>>, vector<8x128xf32>
      tpu.vector_store %arg6[%c0_20, %c0_21], %31 {strides = array<i32>} : memref<8x128xf32, #tpu.memory_space<vmem>>, vector<8x128xf32>,
    } else {
    }
    %c0 = arith.constant 0 : index
    %c0_1 = arith.constant 0 : index
    %3 = vector.load %arg2[%c0, %c0_1] : memref<8x128xf32, #tpu.memory_space<vmem>>, vector<8x128xf32>
    %c0_2 = arith.constant 0 : index
    %c0_3 = arith.constant 0 : index
    %4 = vector.load %arg3[%c0_2, %c0_3] : memref<8x128xf32, #tpu.memory_space<vmem>>, vector<8x128xf32>
    %5 = arith.subf %3, %4 : vector<8x128xf32>
    %6 = arith.mulf %5, %5 : vector<8x128xf32>
    %cst = arith.constant 1.000000e+00 : f32
    %7 = vector.broadcast %cst : f32 to vector<8x128xf32>
    %8 = arith.addf %4, %7 : vector<8x128xf32>
    %9 = tpu.reciprocal %8 {approx = true} : vector<8x128xf32> -> vector<8x128xf32>
    %10 = arith.mulf %8, %9 : vector<8x128xf32>
    %cst_4 = arith.constant 2.000000e+00 : f32
    %11 = vector.broadcast %cst_4 : f32 to vector<8x128xf32>
    %12 = arith.subf %11, %10 : vector<8x128xf32>
    %13 = arith.mulf %9, %12 : vector<8x128xf32>
    %14 = math.absf %5 : vector<8x128xf32>
    %15 = arith.mulf %14, %13 : vector<8x128xf32>
    %c0_5 = arith.constant 0 : index
    %c0_6 = arith.constant 0 : index
    %16 = vector.load %arg5[%c0_5, %c0_6] : memref<8x128xf32, #tpu.memory_space<vmem>>, vector<8x128xf32>
    %17 = vector.shape_cast %6 : vector<8x128xf32> to vector<1x8x128xf32>
    %cst_7 = arith.constant dense<0.000000e+00> : vector<8x128xf32>
    %18 = vector.multi_reduction <add>, %17, %cst_7 [0] : vector<1x8x128xf32> to vector<8x128xf32>
    %19 = arith.addf %16, %18 : vector<8x128xf32>
    %c0_8 = arith.constant 0 : index
    %c0_9 = arith.constant 0 : index
    %20 = vector.load %arg5[%c0_8, %c0_9] : memref<8x128xf32, #tpu.memory_space<vmem>>, vector<8x128xf32>
    tpu.vector_store %arg5[%c0_8, %c0_9], %19 {strides = array<i32>} : memref<8x128xf32, #tpu.memory_space<vmem>>, vector<8x128xf32>,
    %c0_10 = arith.constant 0 : index
    %c0_11 = arith.constant 0 : index
    %21 = vector.load %arg6[%c0_10, %c0_11] : memref<8x128xf32, #tpu.memory_space<vmem>>, vector<8x128xf32>
    %22 = vector.shape_cast %15 : vector<8x128xf32> to vector<1x8x128xf32>
    %cst_12 = arith.constant dense<0.000000e+00> : vector<8x128xf32>
    %23 = vector.multi_reduction <add>, %22, %cst_12 [0] : vector<1x8x128xf32> to vector<8x128xf32>
    %24 = arith.addf %21, %23 : vector<8x128xf32>
    %c0_13 = arith.constant 0 : index
    %c0_14 = arith.constant 0 : index
    %25 = vector.load %arg6[%c0_13, %c0_14] : memref<8x128xf32, #tpu.memory_space<vmem>>, vector<8x128xf32>
    tpu.vector_store %arg6[%c0_13, %c0_14], %24 {strides = array<i32>} : memref<8x128xf32, #tpu.memory_space<vmem>>, vector<8x128xf32>,
    %c2_i32 = arith.constant 2 : i32
    %26 = arith.cmpi eq, %arg0, %c2_i32 : i32
    %27 = arith.extui %26 : i1 to i32
    %c0_i32_15 = arith.constant 0 : i32
    %28 = arith.cmpi ne, %27, %c0_i32_15 : i32
    scf.if %28 {
      %c0_16 = arith.constant 0 : index
      %29 = memref.load %arg1[%c0_16] : memref<2xf32, #tpu.memory_space<smem>>
      %c0_17 = arith.constant 0 : index
      %c0_18 = arith.constant 0 : index
      %30 = vector.load %arg5[%c0_17, %c0_18] : memref<8x128xf32, #tpu.memory_space<vmem>>, vector<8x128xf32>
      %31 = vector.shape_cast %30 : vector<8x128xf32> to vector<1x8x128xf32>
      %cst_19 = arith.constant dense<0.000000e+00> : vector<1xf32>
      %32 = vector.multi_reduction <add>, %31, %cst_19 [1, 2] : vector<1x8x128xf32> to vector<1xf32>
      %33 = vector.shape_cast %32 : vector<1xf32> to vector<1x1x1xf32>
      %34 = vector.extract %33[0, 0, 0] : f32 from vector<1x1x1xf32>
      %35 = arith.mulf %29, %34 : f32
      %c1 = arith.constant 1 : index
      %36 = memref.load %arg1[%c1] : memref<2xf32, #tpu.memory_space<smem>>
      %c0_20 = arith.constant 0 : index
      %c0_21 = arith.constant 0 : index
      %37 = vector.load %arg6[%c0_20, %c0_21] : memref<8x128xf32, #tpu.memory_space<vmem>>, vector<8x128xf32>
      %38 = vector.shape_cast %37 : vector<8x128xf32> to vector<1x8x128xf32>
      %cst_22 = arith.constant dense<0.000000e+00> : vector<1xf32>
      %39 = vector.multi_reduction <add>, %38, %cst_22 [1, 2] : vector<1x8x128xf32> to vector<1xf32>
      %40 = vector.shape_cast %39 : vector<1xf32> to vector<1x1x1xf32>
      %41 = vector.extract %40[0, 0, 0] : f32 from vector<1x1x1xf32>
      %42 = arith.mulf %36, %41 : f32
      %43 = arith.addf %35, %42 : f32
      %c0_23 = arith.constant 0 : index
      %c0_24 = arith.constant 0 : index
      %44 = memref.load %arg4[%c0_23, %c0_24] : memref<1x1xf32, #tpu.memory_space<smem>>
      memref.store %43, %arg4[%c0_23, %c0_24] : memref<1x1xf32, #tpu.memory_space<smem>>
    } else {
    }
    return
  }
  func.func @transform_0(%arg0: i32) -> i32 {
    %c0_i32 = arith.constant 0 : i32
    %c0_i32_0 = arith.constant 0 : i32
    return %c0_i32 : i32
  }
  func.func @transform_1(%arg0: i32) -> (i32, i32) {
    %c0_i32 = arith.constant 0 : i32
    %c0_i32_0 = arith.constant 0 : i32
    return %arg0, %c0_i32 : i32, i32
  }
  func.func @transform_2(%arg0: i32) -> (i32, i32) {
    %c0_i32 = arith.constant 0 : i32
    %c0_i32_0 = arith.constant 0 : i32
    return %arg0, %c0_i32 : i32, i32
  }
  func.func @transform_3(%arg0: i32) -> (i32, i32) {
    %c0_i32 = arith.constant 0 : i32
    %c0_i32_0 = arith.constant 0 : i32
    %c0_i32_1 = arith.constant 0 : i32
    return %c0_i32, %c0_i32_0 : i32, i32
  }
}

</mosaic_0001>

<llo_original>
// kernel: tpu_custom_call.1
$region0: #{tpu_custom_call.1}
  #allocation0 [shape = 'u32[]', space=smem, size = 0x4, offset = 0x4, fixed_abs, tag = 'smem constant byte address 0x4 - core index']
  #allocation1 [shape = 'u32[144,128]{1,0:T(1,128)}', space=vmem, size = 0x12000, scoped, tag = 'internal scratch']
  #allocation2 [shape = 'f32[8,128]{1,0:T(8,128)}', space=vmem, size = 0x1000, scoped, tag = 'scratch operand']
  #allocation3 [shape = 'f32[8,128]{1,0:T(8,128)}', space=vmem, size = 0x1000, scoped, tag = 'scratch operand']
  %s0 = inlined_call_operand.hbm [shape: f32[2], index: 0, kind: input, shape index: {}]
  %s1 = inlined_call_operand.hbm [shape: f32[24,128], index: 1, kind: input, shape index: {}]
  %s2 = inlined_call_operand.hbm [shape: f32[24,128], index: 2, kind: input, shape index: {}]
  %s3 = inlined_call_operand.hbm [shape: f32[1,1], index: 3, kind: output, shape index: {}]
  %s4 = sld [smem:[#allocation0]]
  $region65: #{tpu_custom_call.1} parent=0
    _
  %s6 = ssub.s32 1, %s4
  %s7 = scalar_select 0, %s6, %s4
  $region1: #{tpu_custom_call.1} parent=0
    #allocation4 [shape = 'u8[512]{0}', space=smem, size = 0x200, scoped, tag = 'input window, operand 0, single buffered']
    #allocation5 [shape = 's32[2]{0}', space=sflag, size = 0x8, scoped, tag = 'scoped memory for tpu_custom_call.1']
    #allocation6 [shape = 's32[2]{0}', space=sflag, size = 0x8, scoped, tag = 'scoped memory for tpu_custom_call.1']
    #allocation7 [shape = 's32[2]{0}', space=sflag, size = 0x8, scoped, tag = 'scoped memory for tpu_custom_call.1']
    #allocation8 [shape = 'u8[8192]{0}', space=vmem, size = 0x2000, scoped, tag = 'input window, operand 1']
    #allocation9 [shape = 'u8[8192]{0}', space=vmem, size = 0x2000, scoped, tag = 'input window, operand 2']
    #allocation10 [shape = 's32[2]{0}', space=sflag, size = 0x8, scoped, tag = 'scoped memory for tpu_custom_call.1']
    #allocation11 [shape = 'u8[512]{0}', space=smem, size = 0x200, scoped, tag = 'output window, operand 0, single buffered']
    %8 = vsyncpa [#allocation6], 0
    %9 = vsyncpa [#allocation5], 0
    %s10 = scalar_lea.sflag [#allocation5], 1
    %11 = vsyncpa %s10, 0
    %12 = vsyncpa [#allocation10], 0
    %s13 = scalar_lea.sflag [#allocation10], 1
    %14 = vsyncpa %s13, 0
    %15 = vsyncpa [#allocation7], 0
    loop: start=0, step=1, limit=5
    $region2: #{tpu_custom_call.1} parent=1 // loop_pre_header
      _
    $region3: #{tpu_custom_call.1} parent=1 // loop_header
      %s17 = sphi 0, %s21
      %p18 = scmp.ge.s32.totalorder %s17, 5
      %s25 = sphi 0, %s25
      %s27 = sphi 0, %s25
      %s28 = sphi 0, %s27
      %s42 = sphi 0, %s28
      %s48 = sphi 0, %s50
      %s51 = sphi 0, %s48
      %s52 = sphi 0, %s51
      %s68 = sphi 0, %s52
      %s74 = sphi 0, %s76
      %s77 = sphi 0, %s74
      %s78 = sphi 0, %s77
      %s94 = sphi 0, %s78
      %s98 = sphi 0, %s98
      %s100 = sphi 0, %s98
      %s101 = sphi 0, %s100
      %s115 = sphi 0, %s101
    $region4: #{tpu_custom_call.1} parent=1 // loop_header_branch
      %20 = sbr.rel (%p18) target = $region8
    $region5: #{tpu_custom_call.1} parent=1 // loop_body
      %s22 = ssub.s32 %s17, 1
      %s23 = ssub.s32 %s17, 2
      %s24 = sadd.s32 %s17, 1
      %s26 = sadd.s32 %s25, 1
      %p29 = scmp.eq.s32.totalorder %s17, 2
      %p30 = scmp.ne.s32.totalorder %s25, %s27
      %p31 = scmp.eq.s32.totalorder %s17, 0
      %p32 = por %p30, %p31
      %p33 = scmp.ne.s32.totalorder %s25, %s27
      %p34 = scmp.eq.s32.totalorder %s22, 2
      %p35 = por %p33, %p34
      %p36 = scmp.ne.s32.totalorder %s27, %s28
      %p37 = scmp.eq.s32.totalorder %s22, 0
      %p38 = por %p36, %p37
      %p39 = scmp.ne.s32.totalorder %s27, %s28
      %p40 = scmp.eq.s32.totalorder %s23, 2
      %p41 = por %p39, %p40
      %p43 = scmp.ne.s32.totalorder %s28, %s42
      %p44 = scmp.eq.s32.totalorder %s23, 0
      %p45 = por %p43, %p44
      %s46 = ssub.s32 %s17, %s24
      %p47 = scmp.eq.s32.totalorder %s46, 0
      %s49 = sadd.s32 %s48, 1
      %s50 = scalar_select %p47, %s48, %s49
      %p53 = pneg %p47
      %p54 = scmp.eq.s32.totalorder %s17, 2
      %p55 = por %p53, %p54
      %p56 = scmp.ne.s32.totalorder %s48, %s51
      %p57 = scmp.eq.s32.totalorder %s17, 0
      %p58 = por %p56, %p57
      %p59 = scmp.ne.s32.totalorder %s48, %s51
      %p60 = scmp.eq.s32.totalorder %s22, 2
      %p61 = por %p59, %p60
      %p62 = scmp.ne.s32.totalorder %s51, %s52
      %p63 = scmp.eq.s32.totalorder %s22, 0
      %p64 = por %p62, %p63
      %p65 = scmp.ne.s32.totalorder %s51, %s52
      %p66 = scmp.eq.s32.totalorder %s23, 2
      %p67 = por %p65, %p66
      %p69 = scmp.ne.s32.totalorder %s52, %s68
      %p70 = scmp.eq.s32.totalorder %s23, 0
      %p71 = por %p69, %p70
      %s72 = ssub.s32 %s17, %s24
      %p73 = scmp.eq.s32.totalorder %s72, 0
      %s75 = sadd.s32 %s74, 1
      %s76 = scalar_select %p73, %s74, %s75
      %p79 = pneg %p73
      %p80 = scmp.eq.s32.totalorder %s17, 2
      %p81 = por %p79, %p80
      %p82 = scmp.ne.s32.totalorder %s74, %s77
      %p83 = scmp.eq.s32.totalorder %s17, 0
      %p84 = por %p82, %p83
      %p85 = scmp.ne.s32.totalorder %s74, %s77
      %p86 = scmp.eq.s32.totalorder %s22, 2
      %p87 = por %p85, %p86
      %p88 = scmp.ne.s32.totalorder %s77, %s78
      %p89 = scmp.eq.s32.totalorder %s22, 0
      %p90 = por %p88, %p89
      %p91 = scmp.ne.s32.totalorder %s77, %s78
      %p92 = scmp.eq.s32.totalorder %s23, 2
      %p93 = por %p91, %p92
      %p95 = scmp.ne.s32.totalorder %s78, %s94
      %p96 = scmp.eq.s32.totalorder %s23, 0
      %p97 = por %p95, %p96
      %s99 = sadd.s32 %s98, 1
      %p102 = scmp.eq.s32.totalorder %s17, 2
      %p103 = scmp.ne.s32.totalorder %s98, %s100
      %p104 = scmp.eq.s32.totalorder %s17, 0
      %p105 = por %p103, %p104
      %p106 = scmp.ne.s32.totalorder %s98, %s100
      %p107 = scmp.eq.s32.totalorder %s22, 2
      %p108 = por %p106, %p107
      %p109 = scmp.ne.s32.totalorder %s100, %s101
      %p110 = scmp.eq.s32.totalorder %s22, 0
      %p111 = por %p109, %p110
      %p112 = scmp.ne.s32.totalorder %s100, %s101
      %p113 = scmp.eq.s32.totalorder %s23, 2
      %p114 = por %p112, %p113
      %p116 = scmp.ne.s32.totalorder %s101, %s115
      %p117 = scmp.eq.s32.totalorder %s23, 0
      %p118 = por %p116, %p117
      %p119 = scmp.le.s32.totalorder 1, %s17
      %p120 = scmp.lt.s32.totalorder %s17, 4
      %p121 = pnand %p119, %p120
      %p122 = pneg %p121
      // Predicated region
      $region9: #{tpu_custom_call.1} parent=5 // pred_check
        _
      $region10: #{tpu_custom_call.1} parent=5 // pred_check_branch
        %124 = sbr.rel (%p121) target = $region12
      $region11: #{tpu_custom_call.1} parent=5 // pred_region
        %s125 = ssub.s32 %s17, 1
        // Predicated region
        $region13: #{tpu_custom_call.1} parent=11 // pred_check
          %p126 = pneg %p38
        $region14: #{tpu_custom_call.1} parent=11 // pred_check_branch
          %128 = sbr.rel (%p126) target = $region16
        $region15: #{tpu_custom_call.1} parent=11 // pred_region
          %s130 = ssub.s32 16, 16
          %131 = vsyncadd [#allocation6], %s130
          %134 = dma.hbm_to_smem %s0, 16, [#allocation4], [#allocation6]
        $region16: #{tpu_custom_call.1} parent=11 // pred_fallthru
          _
      $region12: #{tpu_custom_call.1} parent=5 // pred_fallthru
        _
      %p135 = scmp.lt.s32.totalorder %s17, 3
      // Predicated region
      $region17: #{tpu_custom_call.1} parent=5 // pred_check
        %p136 = pneg %p135
      $region18: #{tpu_custom_call.1} parent=5 // pred_check_branch
        %138 = sbr.rel (%p136) target = $region20
      $region19: #{tpu_custom_call.1} parent=5 // pred_region
        // Predicated region
        $region21: #{tpu_custom_call.1} parent=19 // pred_check
          %p139 = pneg %p58
        $region22: #{tpu_custom_call.1} parent=19 // pred_check_branch
          %141 = sbr.rel (%p139) target = $region24
        $region23: #{tpu_custom_call.1} parent=19 // pred_region
          %s142 = sand.u32 %s48, 1
          %s143 = scalar_lea.sflag [#allocation5], %s142
          %s144 = sand.u32 %s48, 1
          %s145 = smul.addr %s144, 8
          %s146 = scalar_lea.vmem [#allocation8], %s145
          %s148 = ssub.s32 128, 128
          %149 = vsyncadd %s143, %s148
          %s150 = smul.addr %s17, 128
          %s151 = scalar_lea.hbm %s1, %s150
          %s153 = sshll.u32 %s146, 4
          %s154 = int_to_ptr.vmem [resolvable:$true] %s153
          %156 = dma.hbm_to_vmem [thread:$0]  %s151, 128, %s154, %s143
        $region24: #{tpu_custom_call.1} parent=19 // pred_fallthru
          _
        // Predicated region
        $region25: #{tpu_custom_call.1} parent=19 // pred_check
          %p157 = pneg %p84
        $region26: #{tpu_custom_call.1} parent=19 // pred_check_branch
          %159 = sbr.rel (%p157) target = $region28
        $region27: #{tpu_custom_call.1} parent=19 // pred_region
          %s160 = sand.u32 %s74, 1
          %s161 = scalar_lea.sflag [#allocation10], %s160
          %s162 = sand.u32 %s74, 1
          %s163 = smul.addr %s162, 8
          %s164 = scalar_lea.vmem [#allocation9], %s163
          %s166 = ssub.s32 128, 128
          %167 = vsyncadd %s161, %s166
          %s168 = smul.addr %s17, 128
          %s169 = scalar_lea.hbm %s2, %s168
          %s171 = sshll.u32 %s164, 4
          %s172 = int_to_ptr.vmem [resolvable:$true] %s171
          %174 = dma.hbm_to_vmem [thread:$0]  %s169, 128, %s172, %s161
        $region28: #{tpu_custom_call.1} parent=19 // pred_fallthru
          _
      $region20: #{tpu_custom_call.1} parent=5 // pred_fallthru
        _
      %p175 = scmp.le.s32.totalorder 1, %s17
      %p176 = scmp.lt.s32.totalorder %s17, 4
      %p177 = pnand %p175, %p176
      %p178 = pneg %p177
      // Predicated region
      $region29: #{tpu_custom_call.1} parent=5 // pred_check
        _
      $region30: #{tpu_custom_call.1} parent=5 // pred_check_branch
        %180 = sbr.rel (%p177) target = $region32
      $region31: #{tpu_custom_call.1} parent=5 // pred_region
        %s181 = ssub.s32 %s17, 1
        // Predicated region
        $region33: #{tpu_custom_call.1} parent=31 // pred_check
          %p182 = pneg %p38
        $region34: #{tpu_custom_call.1} parent=31 // pred_check_branch
          %184 = sbr.rel (%p182) target = $region36
        $region35: #{tpu_custom_call.1} parent=31 // pred_region
          %185 = dma.done [#allocation6], 16
        $region36: #{tpu_custom_call.1} parent=31 // pred_fallthru
          _
        %s186 = sand.u32 %s51, 1
        %s187 = scalar_lea.sflag [#allocation5], %s186
        %s188 = sand.u32 %s51, 1
        %s189 = smul.addr %s188, 8
        %s190 = scalar_lea.vmem [#allocation8], %s189
        // Predicated region
        $region37: #{tpu_custom_call.1} parent=31 // pred_check
          %p191 = pneg %p64
        $region38: #{tpu_custom_call.1} parent=31 // pred_check_branch
          %193 = sbr.rel (%p191) target = $region40
        $region39: #{tpu_custom_call.1} parent=31 // pred_region
          %194 = dma.done %s187, 128
        $region40: #{tpu_custom_call.1} parent=31 // pred_fallthru
          _
        %s195 = sand.u32 %s77, 1
        %s196 = scalar_lea.sflag [#allocation10], %s195
        %s197 = sand.u32 %s77, 1
        %s198 = smul.addr %s197, 8
        %s199 = scalar_lea.vmem [#allocation9], %s198
        // Predicated region
        $region41: #{tpu_custom_call.1} parent=31 // pred_check
          %p200 = pneg %p90
        $region42: #{tpu_custom_call.1} parent=31 // pred_check_branch
          %202 = sbr.rel (%p200) target = $region44
        $region43: #{tpu_custom_call.1} parent=31 // pred_region
          %203 = dma.done %s196, 128
        $region44: #{tpu_custom_call.1} parent=31 // pred_fallthru
          _
        %204 = sfence
        %p205 = pneg %p38
        %p206 = pneg %p35
        %s207 = sand.u32 %s51, 1
        %s208 = scalar_lea.sflag [#allocation5], %s207
        %s209 = sand.u32 %s51, 1
        %s210 = smul.addr %s209, 8
        %s211 = scalar_lea.vmem [#allocation8], %s210
        %p212 = pneg %p64
        %p213 = pneg %p61
        %s214 = sand.u32 %s77, 1
        %s215 = scalar_lea.sflag [#allocation10], %s214
        %s216 = sand.u32 %s77, 1
        %s217 = smul.addr %s216, 8
        %s218 = scalar_lea.vmem [#allocation9], %s217
        %p219 = pneg %p90
        %p220 = pneg %p87
        %p221 = pneg %p111
        %p222 = pneg %p108
        %p223 = scmp.eq.s32.totalorder %s22, 0
        // Predicated region
        $region45: #{tpu_custom_call.1} parent=31 // pred_check
          %p224 = pneg %p223
        $region46: #{tpu_custom_call.1} parent=31 // pred_check_branch
          %226 = sbr.rel (%p224) target = $region48
        $region47: #{tpu_custom_call.1} parent=31 // pred_region
          %227 = vst [vmem:[#allocation2] sm:$0xff] 0.0
          %228 = vst [vmem:[#allocation3] sm:$0xff] 0.0
        $region48: #{tpu_custom_call.1} parent=31 // pred_fallthru
          _
        %v229 = vld [vmem:[%s190] sm:$0xff]
        %v230 = vld [vmem:[%s199] sm:$0xff]
        %v231 = vsub.f32 %v229, %v230
        %v232 = vmul.f32 %v231, %v231
        %v233 = vadd.f32 %v230, 1.0
        %v234 = vrcp.pop %v233
        %v235 = vmul.f32 %v233, %v234
        %v236 = vsub.f32 2.0, %v235
        %v237 = vmul.f32 %v234, %v236
        %v238 = vand.u32 2147483647, %v231
        %v239 = vmul.f32 %v238, %v237
        %v240 = vld [vmem:[#allocation2] sm:$0xff]
        %v241 = vadd.f32 %v232, 0.0
        %v242 = vadd.f32 %v240, %v241
        %243 = vst [vmem:[#allocation2] sm:$0xff] %v242
        %v244 = vld [vmem:[#allocation3] sm:$0xff]
        %v245 = vadd.f32 %v239, 0.0
        %v246 = vadd.f32 %v244, %v245
        %247 = vst [vmem:[#allocation3] sm:$0xff] %v246
        %p248 = scmp.eq.s32.totalorder %s22, 2
        // Predicated region
        $region49: #{tpu_custom_call.1} parent=31 // pred_check
          %p249 = pneg %p248
        $region50: #{tpu_custom_call.1} parent=31 // pred_check_branch
          %251 = sbr.rel (%p249) target = $region52
        $region51: #{tpu_custom_call.1} parent=31 // pred_region
          %s252 = sld [smem:[#allocation4]]
          %v253 = vld [vmem:[#allocation2] sm:$0xff]
          %254 = vadd.xlane.f32.xlu0 %v253
          %v255 = vpop.xlane.xlu0 %254
          %v256 = vrot.slane %v255, 4
          %v257 = vadd.f32 %v255, %v256
          %v258 = vrot.slane %v257, 2
          %v259 = vadd.f32 %v257, %v258
          %v260 = vrot.slane %v259, 1
          %v261 = vadd.f32 %v259, %v260
          %s262 = vtos %v261
          %s263 = smul.f32 %s252, %s262
          %s264 = sld [smem:[#allocation4 + $0x1]]
          %v265 = vld [vmem:[#allocation3] sm:$0xff]
          %266 = vadd.xlane.f32.xlu0 %v265
          %v267 = vpop.xlane.xlu0 %266
          %v268 = vrot.slane %v267, 4
          %v269 = vadd.f32 %v267, %v268
          %v270 = vrot.slane %v269, 2
          %v271 = vadd.f32 %v269, %v270
          %v272 = vrot.slane %v271, 1
          %v273 = vadd.f32 %v271, %v272
          %s274 = vtos %v273
          %s275 = smul.f32 %s264, %s274
          %s276 = sadd.f32 %s263, %s275
          %s277 = scalar_lea.smem [#allocation11], 0
          %278 = sst [smem:[%s277]] %s276
        $region52: #{tpu_custom_call.1} parent=31 // pred_fallthru
          _
        // Predicated region
        $region53: #{tpu_custom_call.1} parent=31 // pred_check
          %p279 = pneg %p108
        $region54: #{tpu_custom_call.1} parent=31 // pred_check_branch
          %281 = sbr.rel (%p279) target = $region56
        $region55: #{tpu_custom_call.1} parent=31 // pred_region
          %s283 = ssub.s32 16, 16
          %284 = vsyncadd [#allocation7], %s283
          %287 = dma.smem_to_hbm [#allocation11], 16, %s3, [#allocation7]
        $region56: #{tpu_custom_call.1} parent=31 // pred_fallthru
          _
        // Predicated region
        $region57: #{tpu_custom_call.1} parent=31 // pred_check
          %p288 = pneg %p108
        $region58: #{tpu_custom_call.1} parent=31 // pred_check_branch
          %290 = sbr.rel (%p288) target = $region60
        $region59: #{tpu_custom_call.1} parent=31 // pred_region
          %291 = dma.done [#allocation7], 16
        $region60: #{tpu_custom_call.1} parent=31 // pred_fallthru
          _
        %292 = sfence
      $region32: #{tpu_custom_call.1} parent=5 // pred_fallthru
        _
      %p293 = scmp.le.s32.totalorder 2, %s17
      // Predicated region
      $region61: #{tpu_custom_call.1} parent=5 // pred_check
        %p294 = pneg %p293
      $region62: #{tpu_custom_call.1} parent=5 // pred_check_branch
        %296 = sbr.rel (%p294) target = $region64
      $region63: #{tpu_custom_call.1} parent=5 // pred_region
        %s297 = ssub.s32 %s17, 2
      $region64: #{tpu_custom_call.1} parent=5 // pred_fallthru
        _
    $region6: #{tpu_custom_call.1} parent=1 // loop_footer
      %s21 = sadd.s32 1, %s17
    $region7: #{tpu_custom_call.1} parent=1 // loop_footer_branch
      %16 = sbr.rel target = $region3
    $region8: #{tpu_custom_call.1} parent=1 // loop_exit
      _
    %298 = vsyncpa [#allocation5], 1
    %s299 = scalar_lea.sflag [#allocation5], 1
    %300 = vsyncpa %s299, 1
    %301 = vsyncpa [#allocation10], 1
    %s302 = scalar_lea.sflag [#allocation10], 1
    %303 = vsyncpa %s302, 1
    %304 = vsyncpa [#allocation6], 1
    %s305 = scalar_lea.sflag [#allocation6], 1
    %306 = vsyncpa %s305, 1
    %307 = vsyncpa [#allocation7], 1
    %s308 = scalar_lea.sflag [#allocation7], 1
    %309 = vsyncpa %s308, 1

</llo_original>
